<compile_context>
chip_gen: v6e
topology: v6e:2x2x1
jax: 0.10.0
libtpu: 0.0.40
codegen_flags: <defaults>
</compile_context>

<pallas_src>
import functools

import jax
import jax.numpy as jnp
from jax.experimental import pallas as pl
from jax.experimental.pallas import tpu as pltpu


def _round_up(n, m):
    return ((n + m - 1) // m) * m


def _default_compute_dtype():
    """bf16 layer-1 math on bf16-VPU chips (v6e/v7x); f32 on v5e and older.
    Either choice is numerically acceptable for this policy MLP."""
    try:
        kind = jax.devices()[0].device_kind.lower()
    except Exception:
        return jnp.float32
    if ("v6" in kind) or ("v7" in kind) or ("trillium" in kind):
        return jnp.bfloat16
    return jnp.float32


def mlp_kernel(xT_ref, w1_ref, b1_ref, w2_ref, b2_ref, oT_ref, *, compute_dtype):
    # xT: (4, Bt)   w1: (256, 4)   b1: (256, 1)
    # w2: (2, 256)  b2: (2, 1)     oT: (2, Bt)
    cd = compute_dtype
    xT = xT_ref[...].astype(cd)        # (4, Bt)  -- tiny cast
    w1 = w1_ref[...].astype(cd)        # (256, 4) -- tiny cast
    in_f = w1.shape[1]                 # 4 (static)

    # ---- Layer 1 on the VPU: h^T = W1 @ x^T + b1 as K=4 broadcast-FMAs ----
    h = b1_ref[...].astype(cd)                          # (256, 1), lane-broadcast
    for k in range(in_f):                               # unrolled at trace time
        h = h + w1[:, k:k + 1] * xT[k:k + 1, :]         # (256,1)*(1,Bt)->(256,Bt)
    h = jnp.maximum(h, 0.0)                             # ReLU (stays in cd)

    # ---- Layer 2 on the MXU: out^T = W2 @ h^T + b2 (bf16 operands, f32 acc) --
    out = jnp.dot(w2_ref[...].astype(jnp.bfloat16),
                  h.astype(jnp.bfloat16),
                  preferred_element_type=jnp.float32)   # (2, Bt) f32
    out = out + b2_ref[...]                             # f32 bias (2, 1)
    oT_ref[...] = out.astype(oT_ref.dtype)


def nn_forward_t(xT, w1, b1, w2, b2, *, block_b=4096, compute_dtype=None):
    """Transposed-layout fused MLP: xT (4, B) -> (2, B).

    Latency path: for B <= 128 a single full-array block is used (no padding,
    no slicing, no transposes).  Throughput path: batch is tiled in lane-dense
    blocks of up to `block_b` lanes, with >=2 grid steps when possible so the
    "parallel" batch axis can shard across TensorCores (v7x)."""
    in_f, B = xT.shape
    hidden, out_f = w1.shape[0], w2.shape[0]
    if compute_dtype is None:
        compute_dtype = _default_compute_dtype()

    lane = 128
    if B <= lane:
        bb = b_pad = max(B, 1)                 # single full-array block
    else:
        n_tiles = pl.cdiv(B, lane)
        # Cap the tile so the grid has >=2 steps (megacore), bounded by block_b.
        tiles_per_block = max(1, min(max(block_b, lane) // lane,
                                     pl.cdiv(n_tiles, 2)))
        bb = tiles_per_block * lane
        b_pad = _round_up(B, bb)
    grid = (b_pad // bb,)

    xT_p = xT if b_pad == B else jnp.pad(xT, ((0, 0), (0, b_pad - B)))

    kernel = functools.partial(mlp_kernel, compute_dtype=compute_dtype)
    outT = pl.pallas_call(
        kernel,
        out_shape=jax.ShapeDtypeStruct((out_f, b_pad), xT.dtype),
        grid=grid,
        in_specs=[
            pl.BlockSpec((in_f, bb), lambda i: (0, i)),        # x^T batch tile
            pl.BlockSpec((hidden, in_f), lambda i: (0, 0)),    # w1 (VMEM-resident)
            pl.BlockSpec((hidden, 1), lambda i: (0, 0)),       # b1
            pl.BlockSpec((out_f, hidden), lambda i: (0, 0)),   # w2
            pl.BlockSpec((out_f, 1), lambda i: (0, 0)),        # b2
        ],
        out_specs=pl.BlockSpec((out_f, bb), lambda i: (0, i)),
        compiler_params=pltpu.CompilerParams(
            dimension_semantics=("parallel",),        # shard batch on v7x 2-TC
            vmem_limit_bytes=48 * 1024 * 1024),       # headroom for 4096-lane tiles
    )(xT_p, w1, b1, w2, b2)

    return outT if b_pad == B else outT[:, :B]


def nn_forward(x, w1, b1, w2, b2, *, block_b=4096, compute_dtype=None):
    """PyTorch-convention wrapper: x (B, 4) -> (B, 2)."""
    return nn_forward_t(x.T, w1, b1, w2, b2, block_b=block_b,
                        compute_dtype=compute_dtype).T


def init_params(key):
    """PyTorch nn.Linear default init: U(-1/sqrt(fan_in), 1/sqrt(fan_in))."""
    k1, k2, k3, k4 = jax.random.split(key, 4)
    bound1 = 1.0 / jnp.sqrt(4.0)
    bound2 = 1.0 / jnp.sqrt(256.0)
    # PyTorch layout: weight (out_features, in_features); bias as (out, 1).
    w1 = jax.random.uniform(k1, (256, 4), jnp.float32, -bound1, bound1)
    b1 = jax.random.uniform(k2, (256, 1), jnp.float32, -bound1, bound1)
    w2 = jax.random.uniform(k3, (2, 256), jnp.float32, -bound2, bound2)
    b2 = jax.random.uniform(k4, (2, 1), jnp.float32, -bound2, bound2)
    return w1, b1, w2, b2


def reference_forward(x, w1, b1, w2, b2):
    h = jnp.maximum(x @ w1.T + b1[:, 0], 0.0)
    return h @ w2.T + b2[:, 0]


if __name__ == "__main__":
    key = jax.random.PRNGKey(0)
    k_params, k_x1, k_x2 = jax.random.split(key, 3)
    w1, b1, w2, b2 = init_params(k_params)

    # bf16 layer-1 / bf16 MXU operands => compare to f32 reference loosely.
    ATOL = RTOL = 3e-2

    # 1) Small-batch latency path (CartPole states): transposed entry point,
    #    single full-array block, no pad / slice / wrapper transposes.
    batch = 8
    x = jax.random.normal(k_x1, (batch, 4), jnp.float32)
    ref = reference_forward(x, w1, b1, w2, b2)
    outT = jax.block_until_ready(nn_forward_t(x.T, w1, b1, w2, b2))
    assert outT.shape == (2, batch)
    assert jnp.allclose(outT.T, ref, atol=ATOL, rtol=RTOL)

    # 2) PyTorch-layout wrapper on the same inputs.
    out = jax.block_until_ready(nn_forward(x, w1, b1, w2, b2))
    assert out.shape == (batch, 2)
    assert jnp.allclose(out, ref, atol=ATOL, rtol=RTOL)

    # 3) Multi-tile grid path (padding + >=2 grid steps for megacore sharding).
    batch2 = 300
    x2 = jax.random.normal(k_x2, (batch2, 4), jnp.float32)
    out2 = jax.block_until_ready(nn_forward(x2, w1, b1, w2, b2))
    ref2 = reference_forward(x2, w1, b1, w2, b2)
    assert out2.shape == (batch2, 2)
    assert jnp.allclose(out2, ref2, atol=ATOL, rtol=RTOL)

    print("KERNEL_OK")
</pallas_src>

<mosaic_0001>
module attributes {stable_mosaic.version = 11 : i64} {
  func.func @mlp_kernel(%arg0: i32, %arg1: memref<4x8xf32, #tpu.memory_space<vmem>>, %arg2: memref<256x4xf32, #tpu.memory_space<vmem>>, %arg3: memref<256x1xf32, #tpu.memory_space<vmem>>, %arg4: memref<2x256xf32, #tpu.memory_space<vmem>>, %arg5: memref<2x1xf32, #tpu.memory_space<vmem>>, %arg6: memref<2x8xf32, #tpu.memory_space<vmem>>) attributes {dimension_semantics = [#tpu.dimension_semantics<parallel>], iteration_bounds = array<i64: 1>, scalar_prefetch = 0 : i64, scratch_operands = 0 : i64, tpu.core_type = #tpu.core_type<tc>, window_params = [{transform_indices = @transform_0, window_bounds = array<i64: 4, 8>}, {pipeline_mode = #tpu.pipeline_mode<synchronous>, transform_indices = @transform_1, window_bounds = array<i64: 256, 4>}, {pipeline_mode = #tpu.pipeline_mode<synchronous>, transform_indices = @transform_2, window_bounds = array<i64: 256, 1>}, {pipeline_mode = #tpu.pipeline_mode<synchronous>, transform_indices = @transform_3, window_bounds = array<i64: 2, 256>}, {pipeline_mode = #tpu.pipeline_mode<synchronous>, transform_indices = @transform_4, window_bounds = array<i64: 2, 1>}, {transform_indices = @transform_5, window_bounds = array<i64: 2, 8>}]} {
    %c0 = arith.constant 0 : index
    %c0_0 = arith.constant 0 : index
    %0 = vector.load %arg1[%c0, %c0_0] : memref<4x8xf32, #tpu.memory_space<vmem>>, vector<4x8xf32>
    %c0_1 = arith.constant 0 : index
    %c0_2 = arith.constant 0 : index
    %1 = vector.load %arg2[%c0_1, %c0_2] : memref<256x4xf32, #tpu.memory_space<vmem>>, vector<256x4xf32>
    %c0_3 = arith.constant 0 : index
    %c0_4 = arith.constant 0 : index
    %2 = vector.load %arg3[%c0_3, %c0_4] : memref<256x1xf32, #tpu.memory_space<vmem>>, vector<256x1xf32>
    %3 = vector.extract_strided_slice %1 {offsets = [0, 0], sizes = [256, 1], strides = [1, 1]} : vector<256x4xf32> to vector<256x1xf32>
    %4 = vector.extract_strided_slice %0 {offsets = [0, 0], sizes = [1, 8], strides = [1, 1]} : vector<4x8xf32> to vector<1x8xf32>
    %5 = vector.broadcast %3 : vector<256x1xf32> to vector<256x8xf32>
    %6 = vector.broadcast %4 : vector<1x8xf32> to vector<256x8xf32>
    %7 = arith.mulf %5, %6 : vector<256x8xf32>
    %8 = vector.broadcast %2 : vector<256x1xf32> to vector<256x8xf32>
    %9 = arith.addf %8, %7 : vector<256x8xf32>
    %10 = vector.extract_strided_slice %1 {offsets = [0, 1], sizes = [256, 1], strides = [1, 1]} : vector<256x4xf32> to vector<256x1xf32>
    %11 = vector.extract_strided_slice %0 {offsets = [1, 0], sizes = [1, 8], strides = [1, 1]} : vector<4x8xf32> to vector<1x8xf32>
    %12 = vector.broadcast %10 : vector<256x1xf32> to vector<256x8xf32>
    %13 = vector.broadcast %11 : vector<1x8xf32> to vector<256x8xf32>
    %14 = arith.mulf %12, %13 : vector<256x8xf32>
    %15 = arith.addf %9, %14 : vector<256x8xf32>
    %16 = vector.extract_strided_slice %1 {offsets = [0, 2], sizes = [256, 1], strides = [1, 1]} : vector<256x4xf32> to vector<256x1xf32>
    %17 = vector.extract_strided_slice %0 {offsets = [2, 0], sizes = [1, 8], strides = [1, 1]} : vector<4x8xf32> to vector<1x8xf32>
    %18 = vector.broadcast %16 : vector<256x1xf32> to vector<256x8xf32>
    %19 = vector.broadcast %17 : vector<1x8xf32> to vector<256x8xf32>
    %20 = arith.mulf %18, %19 : vector<256x8xf32>
    %21 = arith.addf %15, %20 : vector<256x8xf32>
    %22 = vector.extract_strided_slice %1 {offsets = [0, 3], sizes = [256, 1], strides = [1, 1]} : vector<256x4xf32> to vector<256x1xf32>
    %23 = vector.extract_strided_slice %0 {offsets = [3, 0], sizes = [1, 8], strides = [1, 1]} : vector<4x8xf32> to vector<1x8xf32>
    %24 = vector.broadcast %22 : vector<256x1xf32> to vector<256x8xf32>
    %25 = vector.broadcast %23 : vector<1x8xf32> to vector<256x8xf32>
    %26 = arith.mulf %24, %25 : vector<256x8xf32>
    %27 = arith.addf %21, %26 : vector<256x8xf32>
    %cst = arith.constant 0.000000e+00 : f32
    %28 = vector.broadcast %cst : f32 to vector<256x8xf32>
    %29 = arith.maximumf %27, %28 : vector<256x8xf32>
    %c0_5 = arith.constant 0 : index
    %c0_6 = arith.constant 0 : index
    %30 = vector.load %arg4[%c0_5, %c0_6] : memref<2x256xf32, #tpu.memory_space<vmem>>, vector<2x256xf32>
    %31 = arith.truncf %30 : vector<2x256xf32> to vector<2x256xbf16>
    %32 = arith.truncf %29 : vector<256x8xf32> to vector<256x8xbf16>
    %cst_7 = arith.constant dense<0.000000e+00> : vector<2x8xf32>
    %33 = tpu.matmul %31, %32, %cst_7 {dimension_numbers = #tpu.dot_dimension_numbers<[1], [0], [0], [1], [0, 0, 1, 1], [], []>} : vector<2x256xbf16>, vector<256x8xbf16>, vector<2x8xf32> -> vector<2x8xf32>
    %c0_8 = arith.constant 0 : index
    %c0_9 = arith.constant 0 : index
    %34 = vector.load %arg5[%c0_8, %c0_9] : memref<2x1xf32, #tpu.memory_space<vmem>>, vector<2x1xf32>
    %35 = vector.broadcast %34 : vector<2x1xf32> to vector<2x8xf32>
    %36 = arith.addf %33, %35 : vector<2x8xf32>
    %c0_10 = arith.constant 0 : index
    %c0_11 = arith.constant 0 : index
    %37 = vector.load %arg6[%c0_10, %c0_11] : memref<2x8xf32, #tpu.memory_space<vmem>>, vector<2x8xf32>
    tpu.vector_store %arg6[%c0_10, %c0_11], %36 {strides = array<i32>} : memref<2x8xf32, #tpu.memory_space<vmem>>, vector<2x8xf32>,
    return
  }
  func.func @transform_0(%arg0: i32) -> (i32, i32) {
    %c0_i32 = arith.constant 0 : i32
    %c0_i32_0 = arith.constant 0 : i32
    return %c0_i32, %arg0 : i32, i32
  }
  func.func @transform_1(%arg0: i32) -> (i32, i32) {
    %c0_i32 = arith.constant 0 : i32
    %c0_i32_0 = arith.constant 0 : i32
    %c0_i32_1 = arith.constant 0 : i32
    return %c0_i32, %c0_i32_0 : i32, i32
  }
  func.func @transform_2(%arg0: i32) -> (i32, i32) {
    %c0_i32 = arith.constant 0 : i32
    %c0_i32_0 = arith.constant 0 : i32
    %c0_i32_1 = arith.constant 0 : i32
    return %c0_i32, %c0_i32_0 : i32, i32
  }
  func.func @transform_3(%arg0: i32) -> (i32, i32) {
    %c0_i32 = arith.constant 0 : i32
    %c0_i32_0 = arith.constant 0 : i32
    %c0_i32_1 = arith.constant 0 : i32
    return %c0_i32, %c0_i32_0 : i32, i32
  }
  func.func @transform_4(%arg0: i32) -> (i32, i32) {
    %c0_i32 = arith.constant 0 : i32
    %c0_i32_0 = arith.constant 0 : i32
    %c0_i32_1 = arith.constant 0 : i32
    return %c0_i32, %c0_i32_0 : i32, i32
  }
  func.func @transform_5(%arg0: i32) -> (i32, i32) {
    %c0_i32 = arith.constant 0 : i32
    %c0_i32_0 = arith.constant 0 : i32
    return %c0_i32, %arg0 : i32, i32
  }
}

</mosaic_0001>

<llo_original>
// kernel: tpu_custom_call.1
$region0: #{tpu_custom_call.1}
  #allocation0 [shape = 'u32[]', space=smem, size = 0x4, offset = 0x4, fixed_abs, tag = 'smem constant byte address 0x4 - core index']
  #allocation1 [shape = 'u32[144,128]{1,0:T(1,128)}', space=vmem, size = 0x12000, scoped, tag = 'internal scratch']
  %s0 = inlined_call_operand.vmem [shape: f32[4,8], index: 0, kind: input, shape index: {}]
  %s1 = inlined_call_operand.vmem [shape: f32[256,4], index: 1, kind: input, shape index: {}]
  %s2 = inlined_call_operand.vmem [shape: f32[256,1], index: 2, kind: input, shape index: {}]
  %s3 = inlined_call_operand.vmem [shape: f32[2,256], index: 3, kind: input, shape index: {}]
  %s4 = inlined_call_operand.vmem [shape: f32[2,1], index: 4, kind: input, shape index: {}]
  %s5 = inlined_call_operand.hbm [shape: f32[2,8], index: 5, kind: output, shape index: {}]
  %s6 = sld [smem:[#allocation0]]
  $region30: #{tpu_custom_call.1} parent=0
    _
  %s8 = ssub.s32 1, %s6
  %s9 = scalar_select 0, %s8, %s6
  $region1: #{tpu_custom_call.1} parent=0
    #allocation2 [shape = 'u8[1024]{0}', space=vmem, size = 0x400, scoped, tag = 'output window, operand 0, single buffered']
    #allocation3 [shape = 's32[1]{0}', space=sflag, size = 0x4, scoped, tag = 'scoped memory for tpu_custom_call.1']
    %10 = vsyncpa [#allocation3], 0
    // Predicated region
    $region2: #{tpu_custom_call.1} parent=1 // pred_check
      _
    $region3: #{tpu_custom_call.1} parent=1 // pred_check_branch
      %12 = sbr.rel (0) target = $region5
    $region4: #{tpu_custom_call.1} parent=1 // pred_region
      _
    $region5: #{tpu_custom_call.1} parent=1 // pred_fallthru
      _
    // Predicated region
    $region6: #{tpu_custom_call.1} parent=1 // pred_check
      _
    $region7: #{tpu_custom_call.1} parent=1 // pred_check_branch
      %14 = sbr.rel (0) target = $region9
    $region8: #{tpu_custom_call.1} parent=1 // pred_region
      _
    $region9: #{tpu_custom_call.1} parent=1 // pred_fallthru
      _
    // Predicated region
    $region10: #{tpu_custom_call.1} parent=1 // pred_check
      _
    $region11: #{tpu_custom_call.1} parent=1 // pred_check_branch
      %16 = sbr.rel (0) target = $region13
    $region12: #{tpu_custom_call.1} parent=1 // pred_region
      _
    $region13: #{tpu_custom_call.1} parent=1 // pred_fallthru
      _
    // Predicated region
    $region14: #{tpu_custom_call.1} parent=1 // pred_check
      _
    $region15: #{tpu_custom_call.1} parent=1 // pred_check_branch
      %18 = sbr.rel (0) target = $region17
    $region16: #{tpu_custom_call.1} parent=1 // pred_region
      _
    $region17: #{tpu_custom_call.1} parent=1 // pred_fallthru
      _
    // Predicated region
    $region18: #{tpu_custom_call.1} parent=1 // pred_check
      _
    $region19: #{tpu_custom_call.1} parent=1 // pred_check_branch
      %20 = sbr.rel (0) target = $region21
    $region20: #{tpu_custom_call.1} parent=1 // pred_region
      _
    $region21: #{tpu_custom_call.1} parent=1 // pred_fallthru
      _
    %v22 = vld [vmem:[%s0] sm:$0xf]
    %v23 = vld [vmem:[%s1] sm:$0xff]
    %v24 = vld [vmem:[%s1 + $0x8] sm:$0xff]
    %v25 = vld [vmem:[%s1 + $0x10] sm:$0xff]
    %v26 = vld [vmem:[%s1 + $0x18] sm:$0xff]
    %v27 = vld [vmem:[%s1 + $0x20] sm:$0xff]
    %v28 = vld [vmem:[%s1 + $0x28] sm:$0xff]
    %v29 = vld [vmem:[%s1 + $0x30] sm:$0xff]
    %v30 = vld [vmem:[%s1 + $0x38] sm:$0xff]
    %v31 = vld [vmem:[%s1 + $0x40] sm:$0xff]
    %v32 = vld [vmem:[%s1 + $0x48] sm:$0xff]
    %v33 = vld [vmem:[%s1 + $0x50] sm:$0xff]
    %v34 = vld [vmem:[%s1 + $0x58] sm:$0xff]
    %v35 = vld [vmem:[%s1 + $0x60] sm:$0xff]
    %v36 = vld [vmem:[%s1 + $0x68] sm:$0xff]
    %v37 = vld [vmem:[%s1 + $0x70] sm:$0xff]
    %v38 = vld [vmem:[%s1 + $0x78] sm:$0xff]
    %v39 = vld [vmem:[%s1 + $0x80] sm:$0xff]
    %v40 = vld [vmem:[%s1 + $0x88] sm:$0xff]
    %v41 = vld [vmem:[%s1 + $0x90] sm:$0xff]
    %v42 = vld [vmem:[%s1 + $0x98] sm:$0xff]
    %v43 = vld [vmem:[%s1 + $0xa0] sm:$0xff]
    %v44 = vld [vmem:[%s1 + $0xa8] sm:$0xff]
    %v45 = vld [vmem:[%s1 + $0xb0] sm:$0xff]
    %v46 = vld [vmem:[%s1 + $0xb8] sm:$0xff]
    %v47 = vld [vmem:[%s1 + $0xc0] sm:$0xff]
    %v48 = vld [vmem:[%s1 + $0xc8] sm:$0xff]
    %v49 = vld [vmem:[%s1 + $0xd0] sm:$0xff]
    %v50 = vld [vmem:[%s1 + $0xd8] sm:$0xff]
    %v51 = vld [vmem:[%s1 + $0xe0] sm:$0xff]
    %v52 = vld [vmem:[%s1 + $0xe8] sm:$0xff]
    %v53 = vld [vmem:[%s1 + $0xf0] sm:$0xff]
    %v54 = vld [vmem:[%s1 + $0xf8] sm:$0xff]
    %v55 = vld [vmem:[%s2] sm:$0xff]
    %v56 = vld [vmem:[%s2 + $0x8] sm:$0xff]
    %v57 = vld [vmem:[%s2 + $0x10] sm:$0xff]
    %v58 = vld [vmem:[%s2 + $0x18] sm:$0xff]
    %v59 = vld [vmem:[%s2 + $0x20] sm:$0xff]
    %v60 = vld [vmem:[%s2 + $0x28] sm:$0xff]
    %v61 = vld [vmem:[%s2 + $0x30] sm:$0xff]
    %v62 = vld [vmem:[%s2 + $0x38] sm:$0xff]
    %v63 = vld [vmem:[%s2 + $0x40] sm:$0xff]
    %v64 = vld [vmem:[%s2 + $0x48] sm:$0xff]
    %v65 = vld [vmem:[%s2 + $0x50] sm:$0xff]
    %v66 = vld [vmem:[%s2 + $0x58] sm:$0xff]
    %v67 = vld [vmem:[%s2 + $0x60] sm:$0xff]
    %v68 = vld [vmem:[%s2 + $0x68] sm:$0xff]
    %v69 = vld [vmem:[%s2 + $0x70] sm:$0xff]
    %v70 = vld [vmem:[%s2 + $0x78] sm:$0xff]
    %v71 = vld [vmem:[%s2 + $0x80] sm:$0xff]
    %v72 = vld [vmem:[%s2 + $0x88] sm:$0xff]
    %v73 = vld [vmem:[%s2 + $0x90] sm:$0xff]
    %v74 = vld [vmem:[%s2 + $0x98] sm:$0xff]
    %v75 = vld [vmem:[%s2 + $0xa0] sm:$0xff]
    %v76 = vld [vmem:[%s2 + $0xa8] sm:$0xff]
    %v77 = vld [vmem:[%s2 + $0xb0] sm:$0xff]
    %v78 = vld [vmem:[%s2 + $0xb8] sm:$0xff]
    %v79 = vld [vmem:[%s2 + $0xc0] sm:$0xff]
    %v80 = vld [vmem:[%s2 + $0xc8] sm:$0xff]
    %v81 = vld [vmem:[%s2 + $0xd0] sm:$0xff]
    %v82 = vld [vmem:[%s2 + $0xd8] sm:$0xff]
    %v83 = vld [vmem:[%s2 + $0xe0] sm:$0xff]
    %v84 = vld [vmem:[%s2 + $0xe8] sm:$0xff]
    %v85 = vld [vmem:[%s2 + $0xf0] sm:$0xff]
    %v86 = vld [vmem:[%s2 + $0xf8] sm:$0xff]
    %88 = vset.pattern.permute.xlu0 0
    %89 = vperm.xlu0 %88, %v23
    %v90 = vpop.permute.xlu0 %89
    %93 = vset.pattern.permute.xlu0 0
    %94 = vperm.xlu0 %93, %v24
    %v95 = vpop.permute.xlu0 %94
    %98 = vset.pattern.permute.xlu0 0
    %99 = vperm.xlu0 %98, %v25
    %v100 = vpop.permute.xlu0 %99
    %103 = vset.pattern.permute.xlu0 0
    %104 = vperm.xlu0 %103, %v26
    %v105 = vpop.permute.xlu0 %104
    %108 = vset.pattern.permute.xlu0 0
    %109 = vperm.xlu0 %108, %v27
    %v110 = vpop.permute.xlu0 %109
    %113 = vset.pattern.permute.xlu0 0
    %114 = vperm.xlu0 %113, %v28
    %v115 = vpop.permute.xlu0 %114
    %118 = vset.pattern.permute.xlu0 0
    %119 = vperm.xlu0 %118, %v29
    %v120 = vpop.permute.xlu0 %119
    %123 = vset.pattern.permute.xlu0 0
    %124 = vperm.xlu0 %123, %v30
    %v125 = vpop.permute.xlu0 %124
    %128 = vset.pattern.permute.xlu0 0
    %129 = vperm.xlu0 %128, %v31
    %v130 = vpop.permute.xlu0 %129
    %133 = vset.pattern.permute.xlu0 0
    %134 = vperm.xlu0 %133, %v32
    %v135 = vpop.permute.xlu0 %134
    %138 = vset.pattern.permute.xlu0 0
    %139 = vperm.xlu0 %138, %v33
    %v140 = vpop.permute.xlu0 %139
    %143 = vset.pattern.permute.xlu0 0
    %144 = vperm.xlu0 %143, %v34
    %v145 = vpop.permute.xlu0 %144
    %148 = vset.pattern.permute.xlu0 0
    %149 = vperm.xlu0 %148, %v35
    %v150 = vpop.permute.xlu0 %149
    %153 = vset.pattern.permute.xlu0 0
    %154 = vperm.xlu0 %153, %v36
    %v155 = vpop.permute.xlu0 %154
    %158 = vset.pattern.permute.xlu0 0
    %159 = vperm.xlu0 %158, %v37
    %v160 = vpop.permute.xlu0 %159
    %163 = vset.pattern.permute.xlu0 0
    %164 = vperm.xlu0 %163, %v38
    %v165 = vpop.permute.xlu0 %164
    %168 = vset.pattern.permute.xlu0 0
    %169 = vperm.xlu0 %168, %v39
    %v170 = vpop.permute.xlu0 %169
    %173 = vset.pattern.permute.xlu0 0
    %174 = vperm.xlu0 %173, %v40
    %v175 = vpop.permute.xlu0 %174
    %178 = vset.pattern.permute.xlu0 0
    %179 = vperm.xlu0 %178, %v41
    %v180 = vpop.permute.xlu0 %179
    %183 = vset.pattern.permute.xlu0 0
    %184 = vperm.xlu0 %183, %v42
    %v185 = vpop.permute.xlu0 %184
    %188 = vset.pattern.permute.xlu0 0
    %189 = vperm.xlu0 %188, %v43
    %v190 = vpop.permute.xlu0 %189
    %193 = vset.pattern.permute.xlu0 0
    %194 = vperm.xlu0 %193, %v44
    %v195 = vpop.permute.xlu0 %194
    %198 = vset.pattern.permute.xlu0 0
    %199 = vperm.xlu0 %198, %v45
    %v200 = vpop.permute.xlu0 %199
    %203 = vset.pattern.permute.xlu0 0
    %204 = vperm.xlu0 %203, %v46
    %v205 = vpop.permute.xlu0 %204
    %208 = vset.pattern.permute.xlu0 0
    %209 = vperm.xlu0 %208, %v47
    %v210 = vpop.permute.xlu0 %209
    %213 = vset.pattern.permute.xlu0 0
    %214 = vperm.xlu0 %213, %v48
    %v215 = vpop.permute.xlu0 %214
    %218 = vset.pattern.permute.xlu0 0
    %219 = vperm.xlu0 %218, %v49
    %v220 = vpop.permute.xlu0 %219
    %223 = vset.pattern.permute.xlu0 0
    %224 = vperm.xlu0 %223, %v50
    %v225 = vpop.permute.xlu0 %224
    %228 = vset.pattern.permute.xlu0 0
    %229 = vperm.xlu0 %228, %v51
    %v230 = vpop.permute.xlu0 %229
    %233 = vset.pattern.permute.xlu0 0
    %234 = vperm.xlu0 %233, %v52
    %v235 = vpop.permute.xlu0 %234
    %238 = vset.pattern.permute.xlu0 0
    %239 = vperm.xlu0 %238, %v53
    %v240 = vpop.permute.xlu0 %239
    %243 = vset.pattern.permute.xlu0 0
    %244 = vperm.xlu0 %243, %v54
    %v245 = vpop.permute.xlu0 %244
    %v247 = vlaneseq
    %v248 = vshrl.u32 %v247, 7
    %v249 = vsub.s32 0, %v248
    %v250 = vrot.slane %v22, %v249
    %v251 = vmul.f32 %v90, %v250
    %v252 = vmul.f32 %v95, %v250
    %v253 = vmul.f32 %v100, %v250
    %v254 = vmul.f32 %v105, %v250
    %v255 = vmul.f32 %v110, %v250
    %v256 = vmul.f32 %v115, %v250
    %v257 = vmul.f32 %v120, %v250
    %v258 = vmul.f32 %v125, %v250
    %v259 = vmul.f32 %v130, %v250
    %v260 = vmul.f32 %v135, %v250
    %v261 = vmul.f32 %v140, %v250
    %v262 = vmul.f32 %v145, %v250
    %v263 = vmul.f32 %v150, %v250
    %v264 = vmul.f32 %v155, %v250
    %v265 = vmul.f32 %v160, %v250
    %v266 = vmul.f32 %v165, %v250
    %v267 = vmul.f32 %v170, %v250
    %v268 = vmul.f32 %v175, %v250
    %v269 = vmul.f32 %v180, %v250
    %v270 = vmul.f32 %v185, %v250
    %v271 = vmul.f32 %v190, %v250
    %v272 = vmul.f32 %v195, %v250
    %v273 = vmul.f32 %v200, %v250
    %v274 = vmul.f32 %v205, %v250
    %v275 = vmul.f32 %v210, %v250
    %v276 = vmul.f32 %v215, %v250
    %v277 = vmul.f32 %v220, %v250
    %v278 = vmul.f32 %v225, %v250
    %v279 = vmul.f32 %v230, %v250
    %v280 = vmul.f32 %v235, %v250
    %v281 = vmul.f32 %v240, %v250
    %v282 = vmul.f32 %v245, %v250
    %284 = vset.pattern.permute.xlu0 0
    %285 = vperm.xlu0 %284, %v55
    %v286 = vpop.permute.xlu0 %285
    %289 = vset.pattern.permute.xlu0 0
    %290 = vperm.xlu0 %289, %v56
    %v291 = vpop.permute.xlu0 %290
    %294 = vset.pattern.permute.xlu0 0
    %295 = vperm.xlu0 %294, %v57
    %v296 = vpop.permute.xlu0 %295
    %299 = vset.pattern.permute.xlu0 0
    %300 = vperm.xlu0 %299, %v58
    %v301 = vpop.permute.xlu0 %300
    %304 = vset.pattern.permute.xlu0 0
    %305 = vperm.xlu0 %304, %v59
    %v306 = vpop.permute.xlu0 %305
    %309 = vset.pattern.permute.xlu0 0
    %310 = vperm.xlu0 %309, %v60
    %v311 = vpop.permute.xlu0 %310
    %314 = vset.pattern.permute.xlu0 0
    %315 = vperm.xlu0 %314, %v61
    %v316 = vpop.permute.xlu0 %315
    %319 = vset.pattern.permute.xlu0 0
    %320 = vperm.xlu0 %319, %v62
    %v321 = vpop.permute.xlu0 %320
    %324 = vset.pattern.permute.xlu0 0
    %325 = vperm.xlu0 %324, %v63
    %v326 = vpop.permute.xlu0 %325
    %329 = vset.pattern.permute.xlu0 0
    %330 = vperm.xlu0 %329, %v64
    %v331 = vpop.permute.xlu0 %330
    %334 = vset.pattern.permute.xlu0 0
    %335 = vperm.xlu0 %334, %v65
    %v336 = vpop.permute.xlu0 %335
    %339 = vset.pattern.permute.xlu0 0
    %340 = vperm.xlu0 %339, %v66
    %v341 = vpop.permute.xlu0 %340
    %344 = vset.pattern.permute.xlu0 0
    %345 = vperm.xlu0 %344, %v67
    %v346 = vpop.permute.xlu0 %345
    %349 = vset.pattern.permute.xlu0 0
    %350 = vperm.xlu0 %349, %v68
    %v351 = vpop.permute.xlu0 %350
    %354 = vset.pattern.permute.xlu0 0
    %355 = vperm.xlu0 %354, %v69
    %v356 = vpop.permute.xlu0 %355
    %359 = vset.pattern.permute.xlu0 0
    %360 = vperm.xlu0 %359, %v70
    %v361 = vpop.permute.xlu0 %360
    %364 = vset.pattern.permute.xlu0 0
    %365 = vperm.xlu0 %364, %v71
    %v366 = vpop.permute.xlu0 %365
    %369 = vset.pattern.permute.xlu0 0
    %370 = vperm.xlu0 %369, %v72
    %v371 = vpop.permute.xlu0 %370
    %374 = vset.pattern.permute.xlu0 0
    %375 = vperm.xlu0 %374, %v73
    %v376 = vpop.permute.xlu0 %375
    %379 = vset.pattern.permute.xlu0 0
    %380 = vperm.xlu0 %379, %v74
    %v381 = vpop.permute.xlu0 %380
    %384 = vset.pattern.permute.xlu0 0
    %385 = vperm.xlu0 %384, %v75
    %v386 = vpop.permute.xlu0 %385
    %389 = vset.pattern.permute.xlu0 0
    %390 = vperm.xlu0 %389, %v76
    %v391 = vpop.permute.xlu0 %390
    %394 = vset.pattern.permute.xlu0 0
    %395 = vperm.xlu0 %394, %v77
    %v396 = vpop.permute.xlu0 %395
    %399 = vset.pattern.permute.xlu0 0
    %400 = vperm.xlu0 %399, %v78
    %v401 = vpop.permute.xlu0 %400
    %404 = vset.pattern.permute.xlu0 0
    %405 = vperm.xlu0 %404, %v79
    %v406 = vpop.permute.xlu0 %405
    %409 = vset.pattern.permute.xlu0 0
    %410 = vperm.xlu0 %409, %v80
    %v411 = vpop.permute.xlu0 %410
    %414 = vset.pattern.permute.xlu0 0
    %415 = vperm.xlu0 %414, %v81
    %v416 = vpop.permute.xlu0 %415
    %419 = vset.pattern.permute.xlu0 0
    %420 = vperm.xlu0 %419, %v82
    %v421 = vpop.permute.xlu0 %420
    %424 = vset.pattern.permute.xlu0 0
    %425 = vperm.xlu0 %424, %v83
    %v426 = vpop.permute.xlu0 %425
    %429 = vset.pattern.permute.xlu0 0
    %430 = vperm.xlu0 %429, %v84
    %v431 = vpop.permute.xlu0 %430
    %434 = vset.pattern.permute.xlu0 0
    %435 = vperm.xlu0 %434, %v85
    %v436 = vpop.permute.xlu0 %435
    %439 = vset.pattern.permute.xlu0 0
    %440 = vperm.xlu0 %439, %v86
    %v441 = vpop.permute.xlu0 %440
    %v443 = vadd.f32 %v286, %v251
    %v444 = vadd.f32 %v291, %v252
    %v445 = vadd.f32 %v296, %v253
    %v446 = vadd.f32 %v301, %v254
    %v447 = vadd.f32 %v306, %v255
    %v448 = vadd.f32 %v311, %v256
    %v449 = vadd.f32 %v316, %v257
    %v450 = vadd.f32 %v321, %v258
    %v451 = vadd.f32 %v326, %v259
    %v452 = vadd.f32 %v331, %v260
    %v453 = vadd.f32 %v336, %v261
    %v454 = vadd.f32 %v341, %v262
    %v455 = vadd.f32 %v346, %v263
    %v456 = vadd.f32 %v351, %v264
    %v457 = vadd.f32 %v356, %v265
    %v458 = vadd.f32 %v361, %v266
    %v459 = vadd.f32 %v366, %v267
    %v460 = vadd.f32 %v371, %v268
    %v461 = vadd.f32 %v376, %v269
    %v462 = vadd.f32 %v381, %v270
    %v463 = vadd.f32 %v386, %v271
    %v464 = vadd.f32 %v391, %v272
    %v465 = vadd.f32 %v396, %v273
    %v466 = vadd.f32 %v401, %v274
    %v467 = vadd.f32 %v406, %v275
    %v468 = vadd.f32 %v411, %v276
    %v469 = vadd.f32 %v416, %v277
    %v470 = vadd.f32 %v421, %v278
    %v471 = vadd.f32 %v426, %v279
    %v472 = vadd.f32 %v431, %v280
    %v473 = vadd.f32 %v436, %v281
    %v474 = vadd.f32 %v441, %v282
    %475 = vset.pattern.permute.xlu0 1
    %476 = vperm.xlu0 %475, %v23
    %v477 = vpop.permute.xlu0 %476
    %479 = vset.pattern.permute.xlu0 1
    %480 = vperm.xlu0 %479, %v24
    %v481 = vpop.permute.xlu0 %480
    %483 = vset.pattern.permute.xlu0 1
    %484 = vperm.xlu0 %483, %v25
    %v485 = vpop.permute.xlu0 %484
    %487 = vset.pattern.permute.xlu0 1
    %488 = vperm.xlu0 %487, %v26
    %v489 = vpop.permute.xlu0 %488
    %491 = vset.pattern.permute.xlu0 1
    %492 = vperm.xlu0 %491, %v27
    %v493 = vpop.permute.xlu0 %492
    %495 = vset.pattern.permute.xlu0 1
    %496 = vperm.xlu0 %495, %v28
    %v497 = vpop.permute.xlu0 %496
    %499 = vset.pattern.permute.xlu0 1
    %500 = vperm.xlu0 %499, %v29
    %v501 = vpop.permute.xlu0 %500
    %503 = vset.pattern.permute.xlu0 1
    %504 = vperm.xlu0 %503, %v30
    %v505 = vpop.permute.xlu0 %504
    %507 = vset.pattern.permute.xlu0 1
    %508 = vperm.xlu0 %507, %v31
    %v509 = vpop.permute.xlu0 %508
    %511 = vset.pattern.permute.xlu0 1
    %512 = vperm.xlu0 %511, %v32
    %v513 = vpop.permute.xlu0 %512
    %515 = vset.pattern.permute.xlu0 1
    %516 = vperm.xlu0 %515, %v33
    %v517 = vpop.permute.xlu0 %516
    %519 = vset.pattern.permute.xlu0 1
    %520 = vperm.xlu0 %519, %v34
    %v521 = vpop.permute.xlu0 %520
    %523 = vset.pattern.permute.xlu0 1
    %524 = vperm.xlu0 %523, %v35
    %v525 = vpop.permute.xlu0 %524
    %527 = vset.pattern.permute.xlu0 1
    %528 = vperm.xlu0 %527, %v36
    %v529 = vpop.permute.xlu0 %528
    %531 = vset.pattern.permute.xlu0 1
    %532 = vperm.xlu0 %531, %v37
    %v533 = vpop.permute.xlu0 %532
    %535 = vset.pattern.permute.xlu0 1
    %536 = vperm.xlu0 %535, %v38
    %v537 = vpop.permute.xlu0 %536
    %539 = vset.pattern.permute.xlu0 1
    %540 = vperm.xlu0 %539, %v39
    %v541 = vpop.permute.xlu0 %540
    %543 = vset.pattern.permute.xlu0 1
    %544 = vperm.xlu0 %543, %v40
    %v545 = vpop.permute.xlu0 %544
    %547 = vset.pattern.permute.xlu0 1
    %548 = vperm.xlu0 %547, %v41
    %v549 = vpop.permute.xlu0 %548
    %551 = vset.pattern.permute.xlu0 1
    %552 = vperm.xlu0 %551, %v42
    %v553 = vpop.permute.xlu0 %552
    %555 = vset.pattern.permute.xlu0 1
    %556 = vperm.xlu0 %555, %v43
    %v557 = vpop.permute.xlu0 %556
    %559 = vset.pattern.permute.xlu0 1
    %560 = vperm.xlu0 %559, %v44
    %v561 = vpop.permute.xlu0 %560
    %563 = vset.pattern.permute.xlu0 1
    %564 = vperm.xlu0 %563, %v45
    %v565 = vpop.permute.xlu0 %564
    %567 = vset.pattern.permute.xlu0 1
    %568 = vperm.xlu0 %567, %v46
    %v569 = vpop.permute.xlu0 %568
    %571 = vset.pattern.permute.xlu0 1
    %572 = vperm.xlu0 %571, %v47
    %v573 = vpop.permute.xlu0 %572
    %575 = vset.pattern.permute.xlu0 1
    %576 = vperm.xlu0 %575, %v48
    %v577 = vpop.permute.xlu0 %576
    %579 = vset.pattern.permute.xlu0 1
    %580 = vperm.xlu0 %579, %v49
    %v581 = vpop.permute.xlu0 %580
    %583 = vset.pattern.permute.xlu0 1
    %584 = vperm.xlu0 %583, %v50
    %v585 = vpop.permute.xlu0 %584
    %587 = vset.pattern.permute.xlu0 1
    %588 = vperm.xlu0 %587, %v51
    %v589 = vpop.permute.xlu0 %588
    %591 = vset.pattern.permute.xlu0 1
    %592 = vperm.xlu0 %591, %v52
    %v593 = vpop.permute.xlu0 %592
    %595 = vset.pattern.permute.xlu0 1
    %596 = vperm.xlu0 %595, %v53
    %v597 = vpop.permute.xlu0 %596
    %599 = vset.pattern.permute.xlu0 1
    %600 = vperm.xlu0 %599, %v54
    %v601 = vpop.permute.xlu0 %600
    %v603 = vlaneseq
    %v604 = vshrl.u32 %v603, 7
    %v605 = vsub.s32 1, %v604
    %v606 = vrot.slane %v22, %v605
    %v607 = vmul.f32 %v477, %v606
    %v608 = vmul.f32 %v481, %v606
    %v609 = vmul.f32 %v485, %v606
    %v610 = vmul.f32 %v489, %v606
    %v611 = vmul.f32 %v493, %v606
    %v612 = vmul.f32 %v497, %v606
    %v613 = vmul.f32 %v501, %v606
    %v614 = vmul.f32 %v505, %v606
    %v615 = vmul.f32 %v509, %v606
    %v616 = vmul.f32 %v513, %v606
    %v617 = vmul.f32 %v517, %v606
    %v618 = vmul.f32 %v521, %v606
    %v619 = vmul.f32 %v525, %v606
    %v620 = vmul.f32 %v529, %v606
    %v621 = vmul.f32 %v533, %v606
    %v622 = vmul.f32 %v537, %v606
    %v623 = vmul.f32 %v541, %v606
    %v624 = vmul.f32 %v545, %v606
    %v625 = vmul.f32 %v549, %v606
    %v626 = vmul.f32 %v553, %v606
    %v627 = vmul.f32 %v557, %v606
    %v628 = vmul.f32 %v561, %v606
    %v629 = vmul.f32 %v565, %v606
    %v630 = vmul.f32 %v569, %v606
    %v631 = vmul.f32 %v573, %v606
    %v632 = vmul.f32 %v577, %v606
    %v633 = vmul.f32 %v581, %v606
    %v634 = vmul.f32 %v585, %v606
    %v635 = vmul.f32 %v589, %v606
    %v636 = vmul.f32 %v593, %v606
    %v637 = vmul.f32 %v597, %v606
    %v638 = vmul.f32 %v601, %v606
    %v639 = vadd.f32 %v443, %v607
    %v640 = vadd.f32 %v444, %v608
    %v641 = vadd.f32 %v445, %v609
    %v642 = vadd.f32 %v446, %v610
    %v643 = vadd.f32 %v447, %v611
    %v644 = vadd.f32 %v448, %v612
    %v645 = vadd.f32 %v449, %v613
    %v646 = vadd.f32 %v450, %v614
    %v647 = vadd.f32 %v451, %v615
    %v648 = vadd.f32 %v452, %v616
    %v649 = vadd.f32 %v453, %v617
    %v650 = vadd.f32 %v454, %v618
    %v651 = vadd.f32 %v455, %v619
    %v652 = vadd.f32 %v456, %v620
    %v653 = vadd.f32 %v457, %v621
    %v654 = vadd.f32 %v458, %v622
    %v655 = vadd.f32 %v459, %v623
    %v656 = vadd.f32 %v460, %v624
    %v657 = vadd.f32 %v461, %v625
    %v658 = vadd.f32 %v462, %v626
    %v659 = vadd.f32 %v463, %v627
    %v660 = vadd.f32 %v464, %v628
    %v661 = vadd.f32 %v465, %v629
    %v662 = vadd.f32 %v466, %v630
    %v663 = vadd.f32 %v467, %v631
    %v664 = vadd.f32 %v468, %v632
    %v665 = vadd.f32 %v469, %v633
    %v666 = vadd.f32 %v470, %v634
    %v667 = vadd.f32 %v471, %v635
    %v668 = vadd.f32 %v472, %v636
    %v669 = vadd.f32 %v473, %v637
    %v670 = vadd.f32 %v474, %v638
    %671 = vset.pattern.permute.xlu0 2
    %672 = vperm.xlu0 %671, %v23
    %v673 = vpop.permute.xlu0 %672
    %675 = vset.pattern.permute.xlu0 2
    %676 = vperm.xlu0 %675, %v24
    %v677 = vpop.permute.xlu0 %676
    %679 = vset.pattern.permute.xlu0 2
    %680 = vperm.xlu0 %679, %v25
    %v681 = vpop.permute.xlu0 %680
    %683 = vset.pattern.permute.xlu0 2
    %684 = vperm.xlu0 %683, %v26
    %v685 = vpop.permute.xlu0 %684
    %687 = vset.pattern.permute.xlu0 2
    %688 = vperm.xlu0 %687, %v27
    %v689 = vpop.permute.xlu0 %688
    %691 = vset.pattern.permute.xlu0 2
    %692 = vperm.xlu0 %691, %v28
    %v693 = vpop.permute.xlu0 %692
    %695 = vset.pattern.permute.xlu0 2
    %696 = vperm.xlu0 %695, %v29
    %v697 = vpop.permute.xlu0 %696
    %699 = vset.pattern.permute.xlu0 2
    %700 = vperm.xlu0 %699, %v30
    %v701 = vpop.permute.xlu0 %700
    %703 = vset.pattern.permute.xlu0 2
    %704 = vperm.xlu0 %703, %v31
    %v705 = vpop.permute.xlu0 %704
    %707 = vset.pattern.permute.xlu0 2
    %708 = vperm.xlu0 %707, %v32
    %v709 = vpop.permute.xlu0 %708
    %711 = vset.pattern.permute.xlu0 2
    %712 = vperm.xlu0 %711, %v33
    %v713 = vpop.permute.xlu0 %712
    %715 = vset.pattern.permute.xlu0 2
    %716 = vperm.xlu0 %715, %v34
    %v717 = vpop.permute.xlu0 %716
    %719 = vset.pattern.permute.xlu0 2
    %720 = vperm.xlu0 %719, %v35
    %v721 = vpop.permute.xlu0 %720
    %723 = vset.pattern.permute.xlu0 2
    %724 = vperm.xlu0 %723, %v36
    %v725 = vpop.permute.xlu0 %724
    %727 = vset.pattern.permute.xlu0 2
    %728 = vperm.xlu0 %727, %v37
    %v729 = vpop.permute.xlu0 %728
    %731 = vset.pattern.permute.xlu0 2
    %732 = vperm.xlu0 %731, %v38
    %v733 = vpop.permute.xlu0 %732
    %735 = vset.pattern.permute.xlu0 2
    %736 = vperm.xlu0 %735, %v39
    %v737 = vpop.permute.xlu0 %736
    %739 = vset.pattern.permute.xlu0 2
    %740 = vperm.xlu0 %739, %v40
    %v741 = vpop.permute.xlu0 %740
    %743 = vset.pattern.permute.xlu0 2
    %744 = vperm.xlu0 %743, %v41
    %v745 = vpop.permute.xlu0 %744
    %747 = vset.pattern.permute.xlu0 2
    %748 = vperm.xlu0 %747, %v42
    %v749 = vpop.permute.xlu0 %748
    %751 = vset.pattern.permute.xlu0 2
    %752 = vperm.xlu0 %751, %v43
    %v753 = vpop.permute.xlu0 %752
    %755 = vset.pattern.permute.xlu0 2
    %756 = vperm.xlu0 %755, %v44
    %v757 = vpop.permute.xlu0 %756
    %759 = vset.pattern.permute.xlu0 2
    %760 = vperm.xlu0 %759, %v45
    %v761 = vpop.permute.xlu0 %760
    %763 = vset.pattern.permute.xlu0 2
    %764 = vperm.xlu0 %763, %v46
    %v765 = vpop.permute.xlu0 %764
    %767 = vset.pattern.permute.xlu0 2
    %768 = vperm.xlu0 %767, %v47
    %v769 = vpop.permute.xlu0 %768
    %771 = vset.pattern.permute.xlu0 2
    %772 = vperm.xlu0 %771, %v48
    %v773 = vpop.permute.xlu0 %772
    %775 = vset.pattern.permute.xlu0 2
    %776 = vperm.xlu0 %775, %v49
    %v777 = vpop.permute.xlu0 %776
    %779 = vset.pattern.permute.xlu0 2
    %780 = vperm.xlu0 %779, %v50
    %v781 = vpop.permute.xlu0 %780
    %783 = vset.pattern.permute.xlu0 2
    %784 = vperm.xlu0 %783, %v51
    %v785 = vpop.permute.xlu0 %784
    %787 = vset.pattern.permute.xlu0 2
    %788 = vperm.xlu0 %787, %v52
    %v789 = vpop.permute.xlu0 %788
    %791 = vset.pattern.permute.xlu0 2
    %792 = vperm.xlu0 %791, %v53
    %v793 = vpop.permute.xlu0 %792
    %795 = vset.pattern.permute.xlu0 2
    %796 = vperm.xlu0 %795, %v54
    %v797 = vpop.permute.xlu0 %796
    %v799 = vlaneseq
    %v800 = vshrl.u32 %v799, 7
    %v801 = vsub.s32 2, %v800
    %v802 = vrot.slane %v22, %v801
    %v803 = vmul.f32 %v673, %v802
    %v804 = vmul.f32 %v677, %v802
    %v805 = vmul.f32 %v681, %v802
    %v806 = vmul.f32 %v685, %v802
    %v807 = vmul.f32 %v689, %v802
    %v808 = vmul.f32 %v693, %v802
    %v809 = vmul.f32 %v697, %v802
    %v810 = vmul.f32 %v701, %v802
    %v811 = vmul.f32 %v705, %v802
    %v812 = vmul.f32 %v709, %v802
    %v813 = vmul.f32 %v713, %v802
    %v814 = vmul.f32 %v717, %v802
    %v815 = vmul.f32 %v721, %v802
    %v816 = vmul.f32 %v725, %v802
    %v817 = vmul.f32 %v729, %v802
    %v818 = vmul.f32 %v733, %v802
    %v819 = vmul.f32 %v737, %v802
    %v820 = vmul.f32 %v741, %v802
    %v821 = vmul.f32 %v745, %v802
    %v822 = vmul.f32 %v749, %v802
    %v823 = vmul.f32 %v753, %v802
    %v824 = vmul.f32 %v757, %v802
    %v825 = vmul.f32 %v761, %v802
    %v826 = vmul.f32 %v765, %v802
    %v827 = vmul.f32 %v769, %v802
    %v828 = vmul.f32 %v773, %v802
    %v829 = vmul.f32 %v777, %v802
    %v830 = vmul.f32 %v781, %v802
    %v831 = vmul.f32 %v785, %v802
    %v832 = vmul.f32 %v789, %v802
    %v833 = vmul.f32 %v793, %v802
    %v834 = vmul.f32 %v797, %v802
    %v835 = vadd.f32 %v639, %v803
    %v836 = vadd.f32 %v640, %v804
    %v837 = vadd.f32 %v641, %v805
    %v838 = vadd.f32 %v642, %v806
    %v839 = vadd.f32 %v643, %v807
    %v840 = vadd.f32 %v644, %v808
    %v841 = vadd.f32 %v645, %v809
    %v842 = vadd.f32 %v646, %v810
    %v843 = vadd.f32 %v647, %v811
    %v844 = vadd.f32 %v648, %v812
    %v845 = vadd.f32 %v649, %v813
    %v846 = vadd.f32 %v650, %v814
    %v847 = vadd.f32 %v651, %v815
    %v848 = vadd.f32 %v652, %v816
    %v849 = vadd.f32 %v653, %v817
    %v850 = vadd.f32 %v654, %v818
    %v851 = vadd.f32 %v655, %v819
    %v852 = vadd.f32 %v656, %v820
    %v853 = vadd.f32 %v657, %v821
    %v854 = vadd.f32 %v658, %v822
    %v855 = vadd.f32 %v659, %v823
    %v856 = vadd.f32 %v660, %v824
    %v857 = vadd.f32 %v661, %v825
    %v858 = vadd.f32 %v662, %v826
    %v859 = vadd.f32 %v663, %v827
    %v860 = vadd.f32 %v664, %v828
    %v861 = vadd.f32 %v665, %v829
    %v862 = vadd.f32 %v666, %v830
    %v863 = vadd.f32 %v667, %v831
    %v864 = vadd.f32 %v668, %v832
    %v865 = vadd.f32 %v669, %v833
    %v866 = vadd.f32 %v670, %v834
    %867 = vset.pattern.permute.xlu0 3
    %868 = vperm.xlu0 %867, %v23
    %v869 = vpop.permute.xlu0 %868
    %871 = vset.pattern.permute.xlu0 3
    %872 = vperm.xlu0 %871, %v24
    %v873 = vpop.permute.xlu0 %872
    %875 = vset.pattern.permute.xlu0 3
    %876 = vperm.xlu0 %875, %v25
    %v877 = vpop.permute.xlu0 %876
    %879 = vset.pattern.permute.xlu0 3
    %880 = vperm.xlu0 %879, %v26
    %v881 = vpop.permute.xlu0 %880
    %883 = vset.pattern.permute.xlu0 3
    %884 = vperm.xlu0 %883, %v27
    %v885 = vpop.permute.xlu0 %884
    %887 = vset.pattern.permute.xlu0 3
    %888 = vperm.xlu0 %887, %v28
    %v889 = vpop.permute.xlu0 %888
    %891 = vset.pattern.permute.xlu0 3
    %892 = vperm.xlu0 %891, %v29
    %v893 = vpop.permute.xlu0 %892
    %895 = vset.pattern.permute.xlu0 3
    %896 = vperm.xlu0 %895, %v30
    %v897 = vpop.permute.xlu0 %896
    %899 = vset.pattern.permute.xlu0 3
    %900 = vperm.xlu0 %899, %v31
    %v901 = vpop.permute.xlu0 %900
    %903 = vset.pattern.permute.xlu0 3
    %904 = vperm.xlu0 %903, %v32
    %v905 = vpop.permute.xlu0 %904
    %907 = vset.pattern.permute.xlu0 3
    %908 = vperm.xlu0 %907, %v33
    %v909 = vpop.permute.xlu0 %908
    %911 = vset.pattern.permute.xlu0 3
    %912 = vperm.xlu0 %911, %v34
    %v913 = vpop.permute.xlu0 %912
    %915 = vset.pattern.permute.xlu0 3
    %916 = vperm.xlu0 %915, %v35
    %v917 = vpop.permute.xlu0 %916
    %919 = vset.pattern.permute.xlu0 3
    %920 = vperm.xlu0 %919, %v36
    %v921 = vpop.permute.xlu0 %920
    %923 = vset.pattern.permute.xlu0 3
    %924 = vperm.xlu0 %923, %v37
    %v925 = vpop.permute.xlu0 %924
    %927 = vset.pattern.permute.xlu0 3
    %928 = vperm.xlu0 %927, %v38
    %v929 = vpop.permute.xlu0 %928
    %931 = vset.pattern.permute.xlu0 3
    %932 = vperm.xlu0 %931, %v39
    %v933 = vpop.permute.xlu0 %932
    %935 = vset.pattern.permute.xlu0 3
    %936 = vperm.xlu0 %935, %v40
    %v937 = vpop.permute.xlu0 %936
    %939 = vset.pattern.permute.xlu0 3
    %940 = vperm.xlu0 %939, %v41
    %v941 = vpop.permute.xlu0 %940
    %943 = vset.pattern.permute.xlu0 3
    %944 = vperm.xlu0 %943, %v42
    %v945 = vpop.permute.xlu0 %944
    %947 = vset.pattern.permute.xlu0 3
    %948 = vperm.xlu0 %947, %v43
    %v949 = vpop.permute.xlu0 %948
    %951 = vset.pattern.permute.xlu0 3
    %952 = vperm.xlu0 %951, %v44
    %v953 = vpop.permute.xlu0 %952
    %955 = vset.pattern.permute.xlu0 3
    %956 = vperm.xlu0 %955, %v45
    %v957 = vpop.permute.xlu0 %956
    %959 = vset.pattern.permute.xlu0 3
    %960 = vperm.xlu0 %959, %v46
    %v961 = vpop.permute.xlu0 %960
    %963 = vset.pattern.permute.xlu0 3
    %964 = vperm.xlu0 %963, %v47
    %v965 = vpop.permute.xlu0 %964
    %967 = vset.pattern.permute.xlu0 3
    %968 = vperm.xlu0 %967, %v48
    %v969 = vpop.permute.xlu0 %968
    %971 = vset.pattern.permute.xlu0 3
    %972 = vperm.xlu0 %971, %v49
    %v973 = vpop.permute.xlu0 %972
    %975 = vset.pattern.permute.xlu0 3
    %976 = vperm.xlu0 %975, %v50
    %v977 = vpop.permute.xlu0 %976
    %979 = vset.pattern.permute.xlu0 3
    %980 = vperm.xlu0 %979, %v51
    %v981 = vpop.permute.xlu0 %980
    %983 = vset.pattern.permute.xlu0 3
    %984 = vperm.xlu0 %983, %v52
    %v985 = vpop.permute.xlu0 %984
    %987 = vset.pattern.permute.xlu0 3
    %988 = vperm.xlu0 %987, %v53
    %v989 = vpop.permute.xlu0 %988
    %991 = vset.pattern.permute.xlu0 3
    %992 = vperm.xlu0 %991, %v54
    %v993 = vpop.permute.xlu0 %992
    %v995 = vlaneseq
    %v996 = vshrl.u32 %v995, 7
    %v997 = vsub.s32 3, %v996
    %v998 = vrot.slane %v22, %v997
    %v999 = vmul.f32 %v869, %v998
    %v1000 = vmul.f32 %v873, %v998
    %v1001 = vmul.f32 %v877, %v998
    %v1002 = vmul.f32 %v881, %v998
    %v1003 = vmul.f32 %v885, %v998
    %v1004 = vmul.f32 %v889, %v998
    %v1005 = vmul.f32 %v893, %v998
    %v1006 = vmul.f32 %v897, %v998
    %v1007 = vmul.f32 %v901, %v998
    %v1008 = vmul.f32 %v905, %v998
    %v1009 = vmul.f32 %v909, %v998
    %v1010 = vmul.f32 %v913, %v998
    %v1011 = vmul.f32 %v917, %v998
    %v1012 = vmul.f32 %v921, %v998
    %v1013 = vmul.f32 %v925, %v998
    %v1014 = vmul.f32 %v929, %v998
    %v1015 = vmul.f32 %v933, %v998
    %v1016 = vmul.f32 %v937, %v998
    %v1017 = vmul.f32 %v941, %v998
    %v1018 = vmul.f32 %v945, %v998
    %v1019 = vmul.f32 %v949, %v998
    %v1020 = vmul.f32 %v953, %v998
    %v1021 = vmul.f32 %v957, %v998
    %v1022 = vmul.f32 %v961, %v998
    %v1023 = vmul.f32 %v965, %v998
    %v1024 = vmul.f32 %v969, %v998
    %v1025 = vmul.f32 %v973, %v998
    %v1026 = vmul.f32 %v977, %v998
    %v1027 = vmul.f32 %v981, %v998
    %v1028 = vmul.f32 %v985, %v998
    %v1029 = vmul.f32 %v989, %v998
    %v1030 = vmul.f32 %v993, %v998
    %v1031 = vadd.f32 %v835, %v999
    %v1032 = vadd.f32 %v836, %v1000
    %v1033 = vadd.f32 %v837, %v1001
    %v1034 = vadd.f32 %v838, %v1002
    %v1035 = vadd.f32 %v839, %v1003
    %v1036 = vadd.f32 %v840, %v1004
    %v1037 = vadd.f32 %v841, %v1005
    %v1038 = vadd.f32 %v842, %v1006
    %v1039 = vadd.f32 %v843, %v1007
    %v1040 = vadd.f32 %v844, %v1008
    %v1041 = vadd.f32 %v845, %v1009
    %v1042 = vadd.f32 %v846, %v1010
    %v1043 = vadd.f32 %v847, %v1011
    %v1044 = vadd.f32 %v848, %v1012
    %v1045 = vadd.f32 %v849, %v1013
    %v1046 = vadd.f32 %v850, %v1014
    %v1047 = vadd.f32 %v851, %v1015
    %v1048 = vadd.f32 %v852, %v1016
    %v1049 = vadd.f32 %v853, %v1017
    %v1050 = vadd.f32 %v854, %v1018
    %v1051 = vadd.f32 %v855, %v1019
    %v1052 = vadd.f32 %v856, %v1020
    %v1053 = vadd.f32 %v857, %v1021
    %v1054 = vadd.f32 %v858, %v1022
    %v1055 = vadd.f32 %v859, %v1023
    %v1056 = vadd.f32 %v860, %v1024
    %v1057 = vadd.f32 %v861, %v1025
    %v1058 = vadd.f32 %v862, %v1026
    %v1059 = vadd.f32 %v863, %v1027
    %v1060 = vadd.f32 %v864, %v1028
    %v1061 = vadd.f32 %v865, %v1029
    %v1062 = vadd.f32 %v866, %v1030
    %v1063 = vmax.f32 %v1031, 0.0
    %v1064 = vmax.f32 %v1032, 0.0
    %v1065 = vmax.f32 %v1033, 0.0
    %v1066 = vmax.f32 %v1034, 0.0
    %v1067 = vmax.f32 %v1035, 0.0
    %v1068 = vmax.f32 %v1036, 0.0
    %v1069 = vmax.f32 %v1037, 0.0
    %v1070 = vmax.f32 %v1038, 0.0
    %v1071 = vmax.f32 %v1039, 0.0
    %v1072 = vmax.f32 %v1040, 0.0
    %v1073 = vmax.f32 %v1041, 0.0
    %v1074 = vmax.f32 %v1042, 0.0
    %v1075 = vmax.f32 %v1043, 0.0
    %v1076 = vmax.f32 %v1044, 0.0
    %v1077 = vmax.f32 %v1045, 0.0
    %v1078 = vmax.f32 %v1046, 0.0
    %v1079 = vmax.f32 %v1047, 0.0
    %v1080 = vmax.f32 %v1048, 0.0
    %v1081 = vmax.f32 %v1049, 0.0
    %v1082 = vmax.f32 %v1050, 0.0
    %v1083 = vmax.f32 %v1051, 0.0
    %v1084 = vmax.f32 %v1052, 0.0
    %v1085 = vmax.f32 %v1053, 0.0
    %v1086 = vmax.f32 %v1054, 0.0
    %v1087 = vmax.f32 %v1055, 0.0
    %v1088 = vmax.f32 %v1056, 0.0
    %v1089 = vmax.f32 %v1057, 0.0
    %v1090 = vmax.f32 %v1058, 0.0
    %v1091 = vmax.f32 %v1059, 0.0
    %v1092 = vmax.f32 %v1060, 0.0
    %v1093 = vmax.f32 %v1061, 0.0
    %v1094 = vmax.f32 %v1062, 0.0
    %v1095 = vld [vmem:[%s3] sm:$0xf]
    %v1098 = vunpack.c.l.s4 1983009808
    %v1099 = vunpack.c.0.s8 %v1098
    %v1100 = vlaneseq
    %v1101 = vshrl.u32 %v1100, 7
    %v1102 = vsub.s32 %v1099, %v1101
    %v1103 = vrot.slane %v1095, %v1102
    %v1104 = vcombine.high %v1103, %v1103
    %v1107 = vpack.c.bf16 %v1103, %v1103
    %v1108 = vpack.c.bf16 %v1104, %v1104
    %v1109 = vpack.c.bf16 %v1064, %v1063
    %v1110 = vpack.c.bf16 %v1066, %v1065
    %v1111 = vpack.c.bf16 %v1068, %v1067
    %v1112 = vpack.c.bf16 %v1070, %v1069
    %v1113 = vpack.c.bf16 %v1072, %v1071
    %v1114 = vpack.c.bf16 %v1074, %v1073
    %v1115 = vpack.c.bf16 %v1076, %v1075
    %v1116 = vpack.c.bf16 %v1078, %v1077
    %v1117 = vpack.c.bf16 %v1080, %v1079
    %v1118 = vpack.c.bf16 %v1082, %v1081
    %v1119 = vpack.c.bf16 %v1084, %v1083
    %v1120 = vpack.c.bf16 %v1086, %v1085
    %v1121 = vpack.c.bf16 %v1088, %v1087
    %v1122 = vpack.c.bf16 %v1090, %v1089
    %v1123 = vpack.c.bf16 %v1092, %v1091
    %v1124 = vpack.c.bf16 %v1094, %v1093
    %v1125 = vld [vmem:[%s4] sm:$0x3]
    %1127 = vset.pattern.permute.xlu0 0
    %1128 = vperm.xlu0 %1127, %v1125
    %v1129 = vpop.permute.xlu0 %1128
    %1131 = vmatprep.subr.bf16.mxu0 0
    %1132 = vmatpush1.bf16.msra.mxu0 %v1116
    %1133 = vmatprep.subr.bf16.mxu0 0
    %1134 = vmatpush1.bf16.msra.mxu0 %v1115
    %1135 = vmatprep.subr.bf16.mxu0 0
    %1136 = vmatpush1.bf16.msra.mxu0 %v1114
    %1137 = vmatprep.subr.bf16.mxu0 0
    %1138 = vmatpush1.bf16.msra.mxu0 %v1113
    %1139 = vmatprep.subr.bf16.mxu0 0
    %1140 = vmatpush1.bf16.msra.mxu0 %v1112
    %1141 = vmatprep.subr.bf16.mxu0 0
    %1142 = vmatpush1.bf16.msra.mxu0 %v1111
    %1143 = vmatprep.subr.bf16.mxu0 0
    %1144 = vmatpush1.bf16.msra.mxu0 %v1110
    %1145 = vmatprep.subr.bf16.mxu0 0
    %1146 = vmatpush1.bf16.msra.mxu0 %v1109
    %1147 = vmatprep.subr.bf16.mxu0 0
    %1148 = vmatpush2.bf16.msra.mxu0 %v1124
    %1149 = vmatprep.subr.bf16.mxu0 0
    %1150 = vmatpush2.bf16.msra.mxu0 %v1123
    %1151 = vmatprep.subr.bf16.mxu0 0
    %1152 = vmatpush2.bf16.msra.mxu0 %v1122
    %1153 = vmatprep.subr.bf16.mxu0 0
    %1154 = vmatpush2.bf16.msra.mxu0 %v1121
    %1155 = vmatprep.subr.bf16.mxu0 0
    %1156 = vmatpush2.bf16.msra.mxu0 %v1120
    %1157 = vmatprep.subr.bf16.mxu0 0
    %1158 = vmatpush2.bf16.msra.mxu0 %v1119
    %1159 = vmatprep.subr.bf16.mxu0 0
    %1160 = vmatpush2.bf16.msra.mxu0 %v1118
    %1161 = vmatprep.subr.bf16.mxu0 0
    %1162 = vmatpush2.bf16.msra.mxu0 %v1117
    %1163 = vmatprep.mubr.bf16.mxu0 %v1108
    %1164 = vmatmul.mubr.bf16.gmra.mxu0 %v1107
    %v1165 = vpop.f32.mrf.mxu0
    %v1166 = vadd.f32 %v1129, %v1165
    %v1167 = vpop.f32.mrf.mxu0
    %v1168 = vpop.f32.mrf.mxu0
    %v1169 = vpop.f32.mrf.mxu0
    %1170 = vdwg.mxu0
    %vm1171 = vcmask 58368
    %1172 = vst.msk [vmem:[#allocation2] sm:$0x3] %vm1171, %v1166
    // Predicated region
    $region22: #{tpu_custom_call.1} parent=1 // pred_check
      _
    $region23: #{tpu_custom_call.1} parent=1 // pred_check_branch
      %1174 = sbr.rel (0) target = $region25
    $region24: #{tpu_custom_call.1} parent=1 // pred_region
      %s1176 = ssub.s32 32, 32
      %1177 = vsyncadd [#allocation3], %s1176
      %s1179 = sshll.u32 [#allocation2], 4
      %s1180 = int_to_ptr.vmem [resolvable:$true] %s1179
      %1182 = dma.vmem_to_hbm [thread:$0]  %s1180, 32, %s5, [#allocation3]
    $region25: #{tpu_custom_call.1} parent=1 // pred_fallthru
      _
    // Predicated region
    $region26: #{tpu_custom_call.1} parent=1 // pred_check
      _
    $region27: #{tpu_custom_call.1} parent=1 // pred_check_branch
      %1184 = sbr.rel (0) target = $region29
    $region28: #{tpu_custom_call.1} parent=1 // pred_region
      %1185 = dma.done [#allocation3], 32
    $region29: #{tpu_custom_call.1} parent=1 // pred_fallthru
      _
    %1186 = vsyncpa [#allocation3], 1

</llo_original>
